<compile_context>
chip_gen: v7x
topology: tpu7x:2x2x1
jax: 0.10.0
libtpu: 0.0.40
codegen_flags: <defaults>
</compile_context>

<pallas_src>
import functools

import jax
import jax.numpy as jnp
from jax.experimental import pallas as pl
from jax.experimental.pallas import tpu as pltpu

NEG_SLOPE = 0.2  # GATConv default negative_slope


def _round_up(v, m):
    return ((v + m - 1) // m) * m


def _tiles(n):
    """Pick (padded_N, dst_row_tile) so tiles satisfy TPU layout constraints."""
    if n > 256:
        tm = 256                      # multiple of 128 lanes / 32 sublanes (int8)
        return _round_up(n, tm), tm
    np_ = _round_up(n, 32)            # single tile == full array dims
    return np_, np_


# ----------------------------------------------------------------------------
# Kernel 1: head-batched feature projection + attention scalars
#   h_all      = x @ W_all                         [TM, H*F_out]   (one MXU call)
#   alpha_src  = h_all @ A_src (block-diag)        [TM, H]
#   alpha_dst  = h_all @ A_dst (block-diag)        [TM, H]
# ----------------------------------------------------------------------------
def _proj_kernel(x_ref, w_ref, asrc_ref, adst_ref, h_out_ref, asrc_out_ref, adst_out_ref):
    h = jnp.dot(x_ref[...], w_ref[...], preferred_element_type=jnp.float32)
    a_s = jnp.dot(h, asrc_ref[...], preferred_element_type=jnp.float32)
    a_d = jnp.dot(h, adst_ref[...], preferred_element_type=jnp.float32)
    h_out_ref[...] = h.astype(h_out_ref.dtype)       # bf16 (halves HBM/VMEM traffic)
    asrc_out_ref[...] = a_s
    adst_out_ref[...] = a_d


# ----------------------------------------------------------------------------
# Kernel 2: per-dst-tile masked softmax attention + aggregation + fused epilogue
# ----------------------------------------------------------------------------
def _gat_attn_kernel(h_ref, asrc_ref, adst_ref, adj_ref, bias_ref, out_ref, *,
                     heads, f_out, concat, activation):
    adj = adj_ref[...]                 # [TM, Np] int8
    h_all = h_ref[...]                 # [Np, H*F_out] bf16 (shared, resident)
    asrc_all = asrc_ref[...]           # [H, Np] f32
    adst_all = adst_ref[...]           # [TM, H] f32
    neg_big = jnp.float32(-1e30)       # keep finite (not -inf) so rows never NaN

    head_outs = []
    acc = None
    for h in range(heads):             # heads are few; statically unrolled
        asrc = asrc_all[h:h + 1, :]                          # [1, Np]
        adst = adst_all[:, h:h + 1]                          # [TM, 1]
        logits = adst + asrc                                 # [TM, Np]
        logits = jnp.where(logits > 0, logits, NEG_SLOPE * logits)   # LeakyReLU(0.2)
        logits = jnp.where(adj != 0, logits, neg_big)        # single mask
        m = jnp.max(logits, axis=-1, keepdims=True)
        p = jnp.exp(logits - m)                              # masked entries underflow to 0
        denom = jnp.sum(p, axis=-1, keepdims=True)           # >= 1 (self-loop)
        attn = p * pl.reciprocal(denom, approx=True)         # EUP vrcp
        hh = h_all[:, h * f_out:(h + 1) * f_out]             # [Np, f_out] bf16
        o = jnp.dot(attn.astype(jnp.bfloat16), hh,
                    preferred_element_type=jnp.float32)      # [TM, f_out] f32 acc
        if concat:
            head_outs.append(o)
        else:
            acc = o if acc is None else acc + o

    if concat:
        out = head_outs[0] if heads == 1 else jnp.concatenate(head_outs, axis=-1)
    else:
        out = acc * (1.0 / heads)
    out = out + bias_ref[...]

    if activation == "relu":
        out = jnp.maximum(out, 0.0)
    elif activation == "log_softmax":
        mm = jnp.max(out, axis=-1, keepdims=True)
        z = out - mm
        lse = jnp.log(jnp.sum(jnp.exp(z), axis=-1, keepdims=True))
        out = z - lse

    out_ref[...] = out.astype(out_ref.dtype)


# ----------------------------------------------------------------------------
# One GATConv layer (eval mode).  W: [H, F_in, F_out]; att_*: [H, F_out].
# ----------------------------------------------------------------------------
def gat_layer_pallas(x, adj, W, att_src, att_dst, bias, *, concat, activation, row_tile):
    Np, F_in = x.shape
    H, _, F_out = W.shape
    HF = H * F_out
    n_tiles = Np // row_tile

    # Head-batched weight [F_in, H*F_out] and block-diagonal attention matrices.
    W_all = jnp.transpose(W, (1, 0, 2)).reshape(F_in, HF)
    eye = jnp.eye(H, dtype=jnp.float32)
    A_src = (att_src.astype(jnp.float32)[:, :, None] * eye[:, None, :]).reshape(HF, H)
    A_dst = (att_dst.astype(jnp.float32)[:, :, None] * eye[:, None, :]).reshape(HF, H)

    h_all, a_src_col, a_dst_col = pl.pallas_call(
        _proj_kernel,
        out_shape=(jax.ShapeDtypeStruct((Np, HF), jnp.bfloat16),
                   jax.ShapeDtypeStruct((Np, H), jnp.float32),
                   jax.ShapeDtypeStruct((Np, H), jnp.float32)),
        grid_spec=pltpu.PrefetchScalarGridSpec(
            num_scalar_prefetch=0,
            grid=(n_tiles,),
            in_specs=[
                pl.BlockSpec((row_tile, F_in), lambda i: (i, 0)),   # x rows
                pl.BlockSpec((F_in, HF), lambda i: (0, 0)),         # W_all (shared)
                pl.BlockSpec((HF, H), lambda i: (0, 0)),            # A_src (shared)
                pl.BlockSpec((HF, H), lambda i: (0, 0)),            # A_dst (shared)
            ],
            out_specs=[
                pl.BlockSpec((row_tile, HF), lambda i: (i, 0)),
                pl.BlockSpec((row_tile, H), lambda i: (i, 0)),
                pl.BlockSpec((row_tile, H), lambda i: (i, 0)),
            ],
        ),
        compiler_params=pltpu.CompilerParams(dimension_semantics=("parallel",)),
    )(x.astype(jnp.bfloat16), W_all.astype(jnp.bfloat16), A_src, A_dst)

    # Tiny [Np, H] -> [H, Np] transpose (sources on lanes) done once in XLA.
    a_src_row = jnp.transpose(a_src_col)

    out_dim = HF if concat else F_out
    bias_2d = bias.reshape(1, out_dim).astype(jnp.float32)

    kernel = functools.partial(_gat_attn_kernel, heads=H, f_out=F_out,
                               concat=concat, activation=activation)
    out = pl.pallas_call(
        kernel,
        out_shape=jax.ShapeDtypeStruct((Np, out_dim), jnp.float32),
        grid_spec=pltpu.PrefetchScalarGridSpec(
            num_scalar_prefetch=0,
            grid=(n_tiles,),
            in_specs=[
                pl.BlockSpec((Np, HF), lambda i: (0, 0)),         # h_all (shared, bf16)
                pl.BlockSpec((H, Np), lambda i: (0, 0)),          # alpha_src rows (shared)
                pl.BlockSpec((row_tile, H), lambda i: (i, 0)),    # alpha_dst per dst tile
                pl.BlockSpec((row_tile, Np), lambda i: (i, 0)),   # adjacency tile (int8)
                pl.BlockSpec((1, out_dim), lambda i: (0, 0)),     # bias
            ],
            out_specs=pl.BlockSpec((row_tile, out_dim), lambda i: (i, 0)),  # lane-dense
        ),
        compiler_params=pltpu.CompilerParams(
            dimension_semantics=("parallel",),       # dst tiles independent -> megacore
            vmem_limit_bytes=48 * 1024 * 1024,       # explicit budget (fits v7x 64 MiB)
        ),
    )(h_all, a_src_row, a_dst_col, adj, bias_2d)
    return out


# ----------------------------------------------------------------------------
# GAT model (mirrors the PyTorch module; eval mode, deterministic init)
# ----------------------------------------------------------------------------
class GATPallas:
    def __init__(self, in_channels, hidden_channels, out_channels, heads=8, key=None):
        key = jax.random.PRNGKey(42) if key is None else key
        ks = jax.random.split(key, 6)

        def glorot(k, shape):
            fan_in, fan_out = shape[-2], shape[-1]
            lim = jnp.sqrt(6.0 / (fan_in + fan_out))
            return jax.random.uniform(k, shape, jnp.float32, -lim, lim)

        # conv1: GATConv(in, hidden, heads=heads, concat=True)
        self.W1 = glorot(ks[0], (heads, in_channels, hidden_channels))
        self.att_src1 = glorot(ks[1], (heads, hidden_channels))
        self.att_dst1 = glorot(ks[2], (heads, hidden_channels))
        self.b1 = jnp.zeros((heads * hidden_channels,), jnp.float32)
        # conv2: GATConv(hidden*heads, out, heads=1, concat=False)
        self.W2 = glorot(ks[3], (1, hidden_channels * heads, out_channels))
        self.att_src2 = glorot(ks[4], (1, out_channels))
        self.att_dst2 = glorot(ks[5], (1, out_channels))
        self.b2 = jnp.zeros((out_channels,), jnp.float32)

    def __call__(self, x, edge_index):
        N, F_in = x.shape
        Np, row_tile = _tiles(N)

        # Pad node features; padded rows only see their self-loop and are sliced off.
        x_pad = jnp.zeros((Np, F_in), jnp.float32).at[:N].set(x)

        # Dense int8 adjacency: adj[dst, src] = 1 for each edge (src -> dst) + self-loops.
        adj = jnp.zeros((Np, Np), jnp.int8).at[edge_index[1], edge_index[0]].set(1)
        adj = jnp.maximum(adj, jnp.eye(Np, dtype=jnp.int8))

        # conv1 + bias + ReLU fused;  F.dropout(training=False) -> identity.
        h = gat_layer_pallas(x_pad, adj, self.W1, self.att_src1, self.att_dst1, self.b1,
                             concat=True, activation="relu", row_tile=row_tile)
        # conv2 + bias + log_softmax(dim=1) fused.
        out = gat_layer_pallas(h, adj, self.W2, self.att_src2, self.att_dst2, self.b2,
                               concat=False, activation="log_softmax", row_tile=row_tile)
        return out[:N]


if __name__ == "__main__":
    key = jax.random.PRNGKey(0)
    k_x, k_e, k_p = jax.random.split(key, 3)

    N, IN_C, HID_C, OUT_C, HEADS, E = 16, 8, 8, 4, 4, 40
    x = jax.random.normal(k_x, (N, IN_C), dtype=jnp.float32)
    edge_index = jax.random.randint(k_e, (2, E), 0, N, dtype=jnp.int32)

    model = GATPallas(IN_C, HID_C, OUT_C, heads=HEADS, key=k_p)
    out = model(x, edge_index)
    out = jax.block_until_ready(out)

    assert out.shape == (N, OUT_C)
    # log_softmax rows must exponentiate-sum to 1
    assert bool(jnp.allclose(jnp.sum(jnp.exp(out), axis=1), 1.0, atol=1e-4))
    print("KERNEL_OK")
</pallas_src>

<mosaic_0001>
module attributes {stable_mosaic.version = 11 : i64} {
  func.func @_proj_kernel(%arg0: i32, %arg1: memref<32x8xbf16, #tpu.memory_space<vmem>>, %arg2: memref<8x32xbf16, #tpu.memory_space<vmem>>, %arg3: memref<32x4xf32, #tpu.memory_space<vmem>>, %arg4: memref<32x4xf32, #tpu.memory_space<vmem>>, %arg5: memref<32x32xbf16, #tpu.memory_space<vmem>>, %arg6: memref<32x4xf32, #tpu.memory_space<vmem>>, %arg7: memref<32x4xf32, #tpu.memory_space<vmem>>) attributes {dimension_semantics = [#tpu.dimension_semantics<parallel>], iteration_bounds = array<i64: 1>, scalar_prefetch = 0 : i64, scratch_operands = 0 : i64, tpu.core_type = #tpu.core_type<tc>, window_params = [{transform_indices = @transform_0, window_bounds = array<i64: 32, 8>}, {pipeline_mode = #tpu.pipeline_mode<synchronous>, transform_indices = @transform_1, window_bounds = array<i64: 8, 32>}, {pipeline_mode = #tpu.pipeline_mode<synchronous>, transform_indices = @transform_2, window_bounds = array<i64: 32, 4>}, {pipeline_mode = #tpu.pipeline_mode<synchronous>, transform_indices = @transform_3, window_bounds = array<i64: 32, 4>}, {transform_indices = @transform_4, window_bounds = array<i64: 32, 32>}, {transform_indices = @transform_5, window_bounds = array<i64: 32, 4>}, {transform_indices = @transform_6, window_bounds = array<i64: 32, 4>}]} {
    %c0 = arith.constant 0 : index
    %c0_0 = arith.constant 0 : index
    %0 = vector.load %arg1[%c0, %c0_0] : memref<32x8xbf16, #tpu.memory_space<vmem>>, vector<32x8xbf16>
    %c0_1 = arith.constant 0 : index
    %c0_2 = arith.constant 0 : index
    %1 = vector.load %arg2[%c0_1, %c0_2] : memref<8x32xbf16, #tpu.memory_space<vmem>>, vector<8x32xbf16>
    %cst = arith.constant dense<0.000000e+00> : vector<32x32xf32>
    %2 = tpu.matmul %0, %1, %cst {dimension_numbers = #tpu.dot_dimension_numbers<[1], [0], [0], [1], [0, 0, 1, 1], [], []>} : vector<32x8xbf16>, vector<8x32xbf16>, vector<32x32xf32> -> vector<32x32xf32>
    %c0_3 = arith.constant 0 : index
    %c0_4 = arith.constant 0 : index
    %3 = vector.load %arg3[%c0_3, %c0_4] : memref<32x4xf32, #tpu.memory_space<vmem>>, vector<32x4xf32>
    %cst_5 = arith.constant dense<0.000000e+00> : vector<32x4xf32>
    %4 = tpu.matmul %2, %3, %cst_5 {dimension_numbers = #tpu.dot_dimension_numbers<[1], [0], [0], [1], [0, 0, 1, 1], [], []>} : vector<32x32xf32>, vector<32x4xf32>, vector<32x4xf32> -> vector<32x4xf32>
    %c0_6 = arith.constant 0 : index
    %c0_7 = arith.constant 0 : index
    %5 = vector.load %arg4[%c0_6, %c0_7] : memref<32x4xf32, #tpu.memory_space<vmem>>, vector<32x4xf32>
    %cst_8 = arith.constant dense<0.000000e+00> : vector<32x4xf32>
    %6 = tpu.matmul %2, %5, %cst_8 {dimension_numbers = #tpu.dot_dimension_numbers<[1], [0], [0], [1], [0, 0, 1, 1], [], []>} : vector<32x32xf32>, vector<32x4xf32>, vector<32x4xf32> -> vector<32x4xf32>
    %7 = arith.truncf %2 : vector<32x32xf32> to vector<32x32xbf16>
    %c0_9 = arith.constant 0 : index
    %c0_10 = arith.constant 0 : index
    %8 = vector.load %arg5[%c0_9, %c0_10] : memref<32x32xbf16, #tpu.memory_space<vmem>>, vector<32x32xbf16>
    tpu.vector_store %arg5[%c0_9, %c0_10], %7 {strides = array<i32>} : memref<32x32xbf16, #tpu.memory_space<vmem>>, vector<32x32xbf16>,
    %c0_11 = arith.constant 0 : index
    %c0_12 = arith.constant 0 : index
    %9 = vector.load %arg6[%c0_11, %c0_12] : memref<32x4xf32, #tpu.memory_space<vmem>>, vector<32x4xf32>
    tpu.vector_store %arg6[%c0_11, %c0_12], %4 {strides = array<i32>} : memref<32x4xf32, #tpu.memory_space<vmem>>, vector<32x4xf32>,
    %c0_13 = arith.constant 0 : index
    %c0_14 = arith.constant 0 : index
    %10 = vector.load %arg7[%c0_13, %c0_14] : memref<32x4xf32, #tpu.memory_space<vmem>>, vector<32x4xf32>
    tpu.vector_store %arg7[%c0_13, %c0_14], %6 {strides = array<i32>} : memref<32x4xf32, #tpu.memory_space<vmem>>, vector<32x4xf32>,
    return
  }
  func.func @transform_0(%arg0: i32) -> (i32, i32) {
    %c0_i32 = arith.constant 0 : i32
    %c0_i32_0 = arith.constant 0 : i32
    return %arg0, %c0_i32 : i32, i32
  }
  func.func @transform_1(%arg0: i32) -> (i32, i32) {
    %c0_i32 = arith.constant 0 : i32
    %c0_i32_0 = arith.constant 0 : i32
    %c0_i32_1 = arith.constant 0 : i32
    return %c0_i32, %c0_i32_0 : i32, i32
  }
  func.func @transform_2(%arg0: i32) -> (i32, i32) {
    %c0_i32 = arith.constant 0 : i32
    %c0_i32_0 = arith.constant 0 : i32
    %c0_i32_1 = arith.constant 0 : i32
    return %c0_i32, %c0_i32_0 : i32, i32
  }
  func.func @transform_3(%arg0: i32) -> (i32, i32) {
    %c0_i32 = arith.constant 0 : i32
    %c0_i32_0 = arith.constant 0 : i32
    %c0_i32_1 = arith.constant 0 : i32
    return %c0_i32, %c0_i32_0 : i32, i32
  }
  func.func @transform_4(%arg0: i32) -> (i32, i32) {
    %c0_i32 = arith.constant 0 : i32
    %c0_i32_0 = arith.constant 0 : i32
    return %arg0, %c0_i32 : i32, i32
  }
  func.func @transform_5(%arg0: i32) -> (i32, i32) {
    %c0_i32 = arith.constant 0 : i32
    %c0_i32_0 = arith.constant 0 : i32
    return %arg0, %c0_i32 : i32, i32
  }
  func.func @transform_6(%arg0: i32) -> (i32, i32) {
    %c0_i32 = arith.constant 0 : i32
    %c0_i32_0 = arith.constant 0 : i32
    return %arg0, %c0_i32 : i32, i32
  }
}

</mosaic_0001>

<llo_original>
// kernel: tpu_custom_call.1
$region0: #{tpu_custom_call.1}
  #allocation0 [shape = 'u32[]', space=smem, size = 0x4, offset = 0x4, fixed_abs, tag = 'smem constant byte address 0x4 - core index']
  #allocation1 [shape = 'u32[144,128]{1,0:T(1,128)}', space=vmem, size = 0x12000, scoped, tag = 'internal scratch']
  %s0 = inlined_call_operand.vmem [shape: bf16[32,8], index: 0, kind: input, shape index: {}]
  %s1 = inlined_call_operand.vmem [shape: bf16[8,32], index: 1, kind: input, shape index: {}]
  %s2 = inlined_call_operand.vmem [shape: f32[32,4], index: 2, kind: input, shape index: {}]
  %s3 = inlined_call_operand.vmem [shape: f32[32,4], index: 3, kind: input, shape index: {}]
  %s4 = inlined_call_operand.hbm [shape: bf16[32,32], index: 4, kind: output, shape index: {0}]
  %s5 = inlined_call_operand.vmem [shape: f32[32,4], index: 5, kind: output, shape index: {1}]
  %s6 = inlined_call_operand.vmem [shape: f32[32,4], index: 6, kind: output, shape index: {2}]
  %7 = xla_tuple %s4, %s5, %s6
  %s8 = sld [smem:[#allocation0]]
  $region42: #{tpu_custom_call.1} parent=0
    _
  %s10 = ssub.s32 1, %s8
  %s11 = scalar_select 0, %s10, %s8
  $region1: #{tpu_custom_call.1} parent=0
    #allocation2 [shape = 'u8[8192]{0}', space=vmem, size = 0x2000, scoped, tag = 'output window, operand 0, single buffered']
    #allocation3 [shape = 's32[1]{0}', space=sflag, size = 0x4, scoped, tag = 'scoped memory for tpu_custom_call.1']
    %12 = vsyncpa [#allocation3], 0
    // Predicated region
    $region2: #{tpu_custom_call.1} parent=1 // pred_check
      _
    $region3: #{tpu_custom_call.1} parent=1 // pred_check_branch
      %14 = sbr.rel (0) target = $region5
    $region4: #{tpu_custom_call.1} parent=1 // pred_region
      _
    $region5: #{tpu_custom_call.1} parent=1 // pred_fallthru
      _
    // Predicated region
    $region6: #{tpu_custom_call.1} parent=1 // pred_check
      _
    $region7: #{tpu_custom_call.1} parent=1 // pred_check_branch
      %16 = sbr.rel (0) target = $region9
    $region8: #{tpu_custom_call.1} parent=1 // pred_region
      _
    $region9: #{tpu_custom_call.1} parent=1 // pred_fallthru
      _
    // Predicated region
    $region10: #{tpu_custom_call.1} parent=1 // pred_check
      _
    $region11: #{tpu_custom_call.1} parent=1 // pred_check_branch
      %18 = sbr.rel (0) target = $region13
    $region12: #{tpu_custom_call.1} parent=1 // pred_region
      _
    $region13: #{tpu_custom_call.1} parent=1 // pred_fallthru
      _
    // Predicated region
    $region14: #{tpu_custom_call.1} parent=1 // pred_check
      _
    $region15: #{tpu_custom_call.1} parent=1 // pred_check_branch
      %20 = sbr.rel (0) target = $region17
    $region16: #{tpu_custom_call.1} parent=1 // pred_region
      _
    $region17: #{tpu_custom_call.1} parent=1 // pred_fallthru
      _
    %v22 = vld [vmem:[%s0] sm:$0xf]
    %v23 = vld [vmem:[%s0 + $0x4] sm:$0xf]
    %v24 = vld [vmem:[%s0 + $0x8] sm:$0xf]
    %v25 = vld [vmem:[%s0 + $0xc] sm:$0xf]
    %v26 = vld [vmem:[%s1] sm:$0xf]
    %v31 = vunpack.c.l.b16 %v22
    %v32 = vunpack.c.l.b16 %v23
    %v33 = vunpack.c.l.b16 %v24
    %v34 = vunpack.c.l.b16 %v25
    %v35 = vpack.c.b16 %v32, %v31
    %v36 = vpack.c.b16 %v34, %v33
    %vm37 = vcmask 64512
    %v39 = vsel %vm37, %v35, 0
    %v42 = vsel %vm37, %v36, 0
    %vm44 = vcmask 1043456
    %v46 = vsel %vm44, %v26, 0
    %48 = vmatprep.subr.bf16.mxu0 0
    %49 = vmatpush1.bf16.msra.mxu0 %v46
    %50 = vmatprep.subr.bf16.mxu0 0
    %51 = vmatpush1.bf16.msra.mxu0 0
    %52 = vmatprep.subr.bf16.mxu0 0
    %53 = vmatpush1.bf16.msra.mxu0 0
    %54 = vmatprep.subr.bf16.mxu0 0
    %55 = vmatpush1.bf16.msra.mxu0 0
    %56 = vmatprep.subr.bf16.mxu0 0
    %57 = vmatpush1.bf16.msra.mxu0 0
    %58 = vmatprep.subr.bf16.mxu0 0
    %59 = vmatpush1.bf16.msra.mxu0 0
    %60 = vmatprep.subr.bf16.mxu0 0
    %61 = vmatpush1.bf16.msra.mxu0 0
    %62 = vmatprep.subr.bf16.mxu0 0
    %63 = vmatpush1.bf16.msra.mxu0 0
    %64 = vmatprep.subr.bf16.mxu0 0
    %65 = vmatpush1.bf16.msra.mxu0 0
    %66 = vmatprep.subr.bf16.mxu0 0
    %67 = vmatpush1.bf16.msra.mxu0 0
    %68 = vmatprep.subr.bf16.mxu0 0
    %69 = vmatpush1.bf16.msra.mxu0 0
    %70 = vmatprep.subr.bf16.mxu0 0
    %71 = vmatpush1.bf16.msra.mxu0 0
    %72 = vmatprep.subr.bf16.mxu0 0
    %73 = vmatpush1.bf16.msra.mxu0 0
    %74 = vmatprep.subr.bf16.mxu0 0
    %75 = vmatpush1.bf16.msra.mxu0 0
    %76 = vmatprep.subr.bf16.mxu0 0
    %77 = vmatpush1.bf16.msra.mxu0 0
    %78 = vmatprep.subr.bf16.mxu0 0
    %79 = vmatpush1.bf16.msra.mxu0 0
    %80 = vmatprep.mubr.bf16.mxu0 0
    %81 = vmatmul.mubr.bf16.gmra.mrb[0].mxu0 %v39
    %v82 = vpop.f32.mrb[0].mxu0
    %v83 = vadd.f32 0.0, %v82
    %v84 = vpop.f32.mrb[0].mxu0
    %v85 = vpop.f32.mrb[0].mxu0
    %v86 = vadd.f32 0.0, %v85
    %v87 = vpop.f32.mrb[0].mxu0
    %88 = vmatprep.mubr.bf16.mxu0 0
    %89 = vmatmul.mubr.bf16.gmra.mrb[0].mxu0 %v42
    %v90 = vpop.f32.mrb[0].mxu0
    %v91 = vadd.f32 0.0, %v90
    %v92 = vpop.f32.mrb[0].mxu0
    %v93 = vpop.f32.mrb[0].mxu0
    %v94 = vadd.f32 0.0, %v93
    %v95 = vpop.f32.mrb[0].mxu0
    %96 = vdwg.mxu0
    %v97 = vld [vmem:[%s2] sm:$0xff]
    %v98 = vld [vmem:[%s2 + $0x8] sm:$0xff]
    %v99 = vld [vmem:[%s2 + $0x10] sm:$0xff]
    %v100 = vld [vmem:[%s2 + $0x18] sm:$0xff]
    %vm101 = vcmask 261120
    %v103 = vsel %vm101, %v83, 0
    %v106 = vsel %vm101, %v86, 0
    %v109 = vsel %vm101, %v91, 0
    %v112 = vsel %vm101, %v94, 0
    %114 = vmatprep.subr.mxu0 0.0
    %115 = vmatpush1.msra.mxu0 %v97
    %116 = vmatprep.subr.mxu0 0.0
    %117 = vmatpush1.msra.mxu0 %v98
    %118 = vmatprep.subr.mxu0 0.0
    %119 = vmatpush1.msra.mxu0 %v99
    %120 = vmatprep.subr.mxu0 0.0
    %121 = vmatpush1.msra.mxu0 %v100
    %122 = vmatprep.subr.mxu0 0.0
    %123 = vmatpush1.msra.mxu0 0.0
    %124 = vmatprep.subr.mxu0 0.0
    %125 = vmatpush1.msra.mxu0 0.0
    %126 = vmatprep.subr.mxu0 0.0
    %127 = vmatpush1.msra.mxu0 0.0
    %128 = vmatprep.subr.mxu0 0.0
    %129 = vmatpush1.msra.mxu0 0.0
    %130 = vmatprep.subr.mxu0 0.0
    %131 = vmatpush1.msra.mxu0 0.0
    %132 = vmatprep.subr.mxu0 0.0
    %133 = vmatpush1.msra.mxu0 0.0
    %134 = vmatprep.subr.mxu0 0.0
    %135 = vmatpush1.msra.mxu0 0.0
    %136 = vmatprep.subr.mxu0 0.0
    %137 = vmatpush1.msra.mxu0 0.0
    %138 = vmatprep.subr.mxu0 0.0
    %139 = vmatpush1.msra.mxu0 0.0
    %140 = vmatprep.subr.mxu0 0.0
    %141 = vmatpush1.msra.mxu0 0.0
    %142 = vmatprep.subr.mxu0 0.0
    %143 = vmatpush1.msra.mxu0 0.0
    %144 = vmatprep.subr.mxu0 0.0
    %145 = vmatpush1.msra.mxu0 0.0
    %146 = vmatprep.subr.mxu0 0.0
    %147 = vmatpush1.msra.mxu0 0.0
    %148 = vmatprep.subr.mxu0 0.0
    %149 = vmatpush1.msra.mxu0 0.0
    %150 = vmatprep.subr.mxu0 0.0
    %151 = vmatpush1.msra.mxu0 0.0
    %152 = vmatprep.subr.mxu0 0.0
    %153 = vmatpush1.msra.mxu0 0.0
    %154 = vmatprep.subr.mxu0 0.0
    %155 = vmatpush1.msra.mxu0 0.0
    %156 = vmatprep.subr.mxu0 0.0
    %157 = vmatpush1.msra.mxu0 0.0
    %158 = vmatprep.subr.mxu0 0.0
    %159 = vmatpush1.msra.mxu0 0.0
    %160 = vmatprep.subr.mxu0 0.0
    %161 = vmatpush1.msra.mxu0 0.0
    %162 = vmatprep.subr.mxu0 0.0
    %163 = vmatpush1.msra.mxu0 0.0
    %164 = vmatprep.subr.mxu0 0.0
    %165 = vmatpush1.msra.mxu0 0.0
    %166 = vmatprep.subr.mxu0 0.0
    %167 = vmatpush1.msra.mxu0 0.0
    %168 = vmatprep.subr.mxu0 0.0
    %169 = vmatpush1.msra.mxu0 0.0
    %170 = vmatprep.subr.mxu0 0.0
    %171 = vmatpush1.msra.mxu0 0.0
    %172 = vmatprep.subr.mxu0 0.0
    %173 = vmatpush1.msra.mxu0 0.0
    %174 = vmatprep.subr.mxu0 0.0
    %175 = vmatpush1.msra.mxu0 0.0
    %176 = vmatprep.subr.mxu0 0.0
    %177 = vmatpush1.msra.mxu0 0.0
    %178 = vmatprep.mubr.f32.mxu0 0.0
    %179 = vmatmul.mubr.f32.gmra.mrb[0].mxu0 %v103
    %v180 = vpop.f32.mrb[0].mxu0
    %v181 = vadd.f32 0.0, %v180
    %v182 = vpop.f32.mrb[0].mxu0
    %183 = vmatprep.mubr.f32.mxu0 0.0
    %184 = vmatmul.mubr.f32.gmra.mrb[0].mxu0 %v106
    %v185 = vpop.f32.mrb[0].mxu0
    %v186 = vadd.f32 0.0, %v185
    %v187 = vpop.f32.mrb[0].mxu0
    %188 = vmatprep.mubr.f32.mxu0 0.0
    %189 = vmatmul.mubr.f32.gmra.mrb[0].mxu0 %v109
    %v190 = vpop.f32.mrb[0].mxu0
    %v191 = vadd.f32 0.0, %v190
    %v192 = vpop.f32.mrb[0].mxu0
    %193 = vmatprep.mubr.f32.mxu0 0.0
    %194 = vmatmul.mubr.f32.gmra.mrb[0].mxu0 %v112
    %v195 = vpop.f32.mrb[0].mxu0
    %v196 = vadd.f32 0.0, %v195
    %v197 = vpop.f32.mrb[0].mxu0
    %198 = vdwg.mxu0
    %v199 = vld [vmem:[%s3] sm:$0xff]
    %v200 = vld [vmem:[%s3 + $0x8] sm:$0xff]
    %v201 = vld [vmem:[%s3 + $0x10] sm:$0xff]
    %v202 = vld [vmem:[%s3 + $0x18] sm:$0xff]
    %203 = vmatprep.subr.mxu0 0.0
    %204 = vmatpush1.msra.mxu0 %v199
    %205 = vmatprep.subr.mxu0 0.0
    %206 = vmatpush1.msra.mxu0 %v200
    %207 = vmatprep.subr.mxu0 0.0
    %208 = vmatpush1.msra.mxu0 %v201
    %209 = vmatprep.subr.mxu0 0.0
    %210 = vmatpush1.msra.mxu0 %v202
    %211 = vmatprep.subr.mxu0 0.0
    %212 = vmatpush1.msra.mxu0 0.0
    %213 = vmatprep.subr.mxu0 0.0
    %214 = vmatpush1.msra.mxu0 0.0
    %215 = vmatprep.subr.mxu0 0.0
    %216 = vmatpush1.msra.mxu0 0.0
    %217 = vmatprep.subr.mxu0 0.0
    %218 = vmatpush1.msra.mxu0 0.0
    %219 = vmatprep.subr.mxu0 0.0
    %220 = vmatpush1.msra.mxu0 0.0
    %221 = vmatprep.subr.mxu0 0.0
    %222 = vmatpush1.msra.mxu0 0.0
    %223 = vmatprep.subr.mxu0 0.0
    %224 = vmatpush1.msra.mxu0 0.0
    %225 = vmatprep.subr.mxu0 0.0
    %226 = vmatpush1.msra.mxu0 0.0
    %227 = vmatprep.subr.mxu0 0.0
    %228 = vmatpush1.msra.mxu0 0.0
    %229 = vmatprep.subr.mxu0 0.0
    %230 = vmatpush1.msra.mxu0 0.0
    %231 = vmatprep.subr.mxu0 0.0
    %232 = vmatpush1.msra.mxu0 0.0
    %233 = vmatprep.subr.mxu0 0.0
    %234 = vmatpush1.msra.mxu0 0.0
    %235 = vmatprep.subr.mxu0 0.0
    %236 = vmatpush1.msra.mxu0 0.0
    %237 = vmatprep.subr.mxu0 0.0
    %238 = vmatpush1.msra.mxu0 0.0
    %239 = vmatprep.subr.mxu0 0.0
    %240 = vmatpush1.msra.mxu0 0.0
    %241 = vmatprep.subr.mxu0 0.0
    %242 = vmatpush1.msra.mxu0 0.0
    %243 = vmatprep.subr.mxu0 0.0
    %244 = vmatpush1.msra.mxu0 0.0
    %245 = vmatprep.subr.mxu0 0.0
    %246 = vmatpush1.msra.mxu0 0.0
    %247 = vmatprep.subr.mxu0 0.0
    %248 = vmatpush1.msra.mxu0 0.0
    %249 = vmatprep.subr.mxu0 0.0
    %250 = vmatpush1.msra.mxu0 0.0
    %251 = vmatprep.subr.mxu0 0.0
    %252 = vmatpush1.msra.mxu0 0.0
    %253 = vmatprep.subr.mxu0 0.0
    %254 = vmatpush1.msra.mxu0 0.0
    %255 = vmatprep.subr.mxu0 0.0
    %256 = vmatpush1.msra.mxu0 0.0
    %257 = vmatprep.subr.mxu0 0.0
    %258 = vmatpush1.msra.mxu0 0.0
    %259 = vmatprep.subr.mxu0 0.0
    %260 = vmatpush1.msra.mxu0 0.0
    %261 = vmatprep.subr.mxu0 0.0
    %262 = vmatpush1.msra.mxu0 0.0
    %263 = vmatprep.subr.mxu0 0.0
    %264 = vmatpush1.msra.mxu0 0.0
    %265 = vmatprep.subr.mxu0 0.0
    %266 = vmatpush1.msra.mxu0 0.0
    %267 = vmatprep.mubr.f32.mxu0 0.0
    %268 = vmatmul.mubr.f32.gmra.mrb[0].mxu0 %v103
    %v269 = vpop.f32.mrb[0].mxu0
    %v270 = vadd.f32 0.0, %v269
    %v271 = vpop.f32.mrb[0].mxu0
    %272 = vmatprep.mubr.f32.mxu0 0.0
    %273 = vmatmul.mubr.f32.gmra.mrb[0].mxu0 %v106
    %v274 = vpop.f32.mrb[0].mxu0
    %v275 = vadd.f32 0.0, %v274
    %v276 = vpop.f32.mrb[0].mxu0
    %277 = vmatprep.mubr.f32.mxu0 0.0
    %278 = vmatmul.mubr.f32.gmra.mrb[0].mxu0 %v109
    %v279 = vpop.f32.mrb[0].mxu0
    %v280 = vadd.f32 0.0, %v279
    %v281 = vpop.f32.mrb[0].mxu0
    %282 = vmatprep.mubr.f32.mxu0 0.0
    %283 = vmatmul.mubr.f32.gmra.mrb[0].mxu0 %v112
    %v284 = vpop.f32.mrb[0].mxu0
    %v285 = vadd.f32 0.0, %v284
    %v286 = vpop.f32.mrb[0].mxu0
    %287 = vdwg.mxu0
    %v288 = vpack.c.bf16 %v86, %v83
    %v289 = vpack.c.bf16 %v94, %v91
    %v292 = vunpack.c.l.b16 %v288
    %v293 = vunpack.c.h.b16 %v288
    %v294 = vunpack.c.l.b16 %v289
    %v295 = vunpack.c.h.b16 %v289
    %v296 = vpack.c.b16 %v292, %v292
    %v297 = vpack.c.b16 %v293, %v293
    %v298 = vpack.c.b16 %v294, %v294
    %v299 = vpack.c.b16 %v295, %v295
    %vm304 = vcmask 257024
    %305 = vst.msk [vmem:[#allocation2] sm:$0xf] %vm304, %v296
    %306 = vst.msk [vmem:[#allocation2 + $0x4] sm:$0xf] %vm304, %v297
    %307 = vst.msk [vmem:[#allocation2 + $0x8] sm:$0xf] %vm304, %v298
    %308 = vst.msk [vmem:[#allocation2 + $0xc] sm:$0xf] %vm304, %v299
    %vm309 = vcmask 31744
    %310 = vst.msk [vmem:[%s5] sm:$0xff] %vm309, %v181
    %311 = vst.msk [vmem:[%s5 + $0x8] sm:$0xff] %vm309, %v186
    %312 = vst.msk [vmem:[%s5 + $0x10] sm:$0xff] %vm309, %v191
    %313 = vst.msk [vmem:[%s5 + $0x18] sm:$0xff] %vm309, %v196
    %314 = vst.msk [vmem:[%s6] sm:$0xff] %vm309, %v270
    %315 = vst.msk [vmem:[%s6 + $0x8] sm:$0xff] %vm309, %v275
    %316 = vst.msk [vmem:[%s6 + $0x10] sm:$0xff] %vm309, %v280
    %317 = vst.msk [vmem:[%s6 + $0x18] sm:$0xff] %vm309, %v285
    // Predicated region
    $region18: #{tpu_custom_call.1} parent=1 // pred_check
      _
    $region19: #{tpu_custom_call.1} parent=1 // pred_check_branch
      %319 = sbr.rel (0) target = $region21
    $region20: #{tpu_custom_call.1} parent=1 // pred_region
      %s321 = ssub.s32 256, 256
      %322 = vsyncadd [#allocation3], %s321
      %s323 = sshll.u32 [#allocation2], 4
      %s324 = int_to_ptr.vmem [resolvable:$true] %s323
      %329 = dma.vmem_to_hbm [thread:$0]  %s324, 256, %s4, [#allocation3], 64, 64, 4
    $region21: #{tpu_custom_call.1} parent=1 // pred_fallthru
      _
    // Predicated region
    $region22: #{tpu_custom_call.1} parent=1 // pred_check
      _
    $region23: #{tpu_custom_call.1} parent=1 // pred_check_branch
      %331 = sbr.rel (0) target = $region25
    $region24: #{tpu_custom_call.1} parent=1 // pred_region
      _
    $region25: #{tpu_custom_call.1} parent=1 // pred_fallthru
      _
    // Predicated region
    $region26: #{tpu_custom_call.1} parent=1 // pred_check
      _
    $region27: #{tpu_custom_call.1} parent=1 // pred_check_branch
      %333 = sbr.rel (0) target = $region29
    $region28: #{tpu_custom_call.1} parent=1 // pred_region
      _
    $region29: #{tpu_custom_call.1} parent=1 // pred_fallthru
      _
    // Predicated region
    $region30: #{tpu_custom_call.1} parent=1 // pred_check
      _
    $region31: #{tpu_custom_call.1} parent=1 // pred_check_branch
      %335 = sbr.rel (0) target = $region33
    $region32: #{tpu_custom_call.1} parent=1 // pred_region
      %336 = dma.done [#allocation3], 256
    $region33: #{tpu_custom_call.1} parent=1 // pred_fallthru
      _
    // Predicated region
    $region34: #{tpu_custom_call.1} parent=1 // pred_check
      _
    $region35: #{tpu_custom_call.1} parent=1 // pred_check_branch
      %338 = sbr.rel (0) target = $region37
    $region36: #{tpu_custom_call.1} parent=1 // pred_region
      _
    $region37: #{tpu_custom_call.1} parent=1 // pred_fallthru
      _
    // Predicated region
    $region38: #{tpu_custom_call.1} parent=1 // pred_check
      _
    $region39: #{tpu_custom_call.1} parent=1 // pred_check_branch
      %340 = sbr.rel (0) target = $region41
    $region40: #{tpu_custom_call.1} parent=1 // pred_region
      _
    $region41: #{tpu_custom_call.1} parent=1 // pred_fallthru
      _
    %341 = vsyncpa [#allocation3], 1

</llo_original>
